<compile_context>
chip_gen: v7x
topology: tpu7x:2x2x1
jax: 0.10.0
libtpu: 0.0.40
codegen_flags: <defaults>
</compile_context>

<pallas_src>
import functools

import jax
import jax.numpy as jnp
import numpy as np
from jax.experimental import pallas as pl
from jax.experimental.pallas import tpu as pltpu

ANCHORS = [[16, 8], [23, 103], [28, 23], [56, 47], [96, 123], [157, 248]]

# Budget for the double-buffered (pred-in + out) VMEM blocks and the scoped
# VMEM limit we request.  24/32 MiB is safe on v5e (16 MiB default scoped),
# v6e (32 MiB default / 128 physical) and v7x (32 MiB default / 64 physical).
_VMEM_BLOCK_BUDGET = 24 * 1024 * 1024
_VMEM_LIMIT_BYTES = 32 * 1024 * 1024


def _yolo_kernel(anch_ref, gxy_ref, pred_ref, out_ref, *, stride):
    """Decode one (ba_blk, rows, s_blk) block of YOLO predictions.

    anch_ref: (ba_blk, 2, 1)    anchor (w, h) in pixel units per (batch, anchor)
    gxy_ref : (1, 2, s_blk)     grid offsets (gx, gy) pre-scaled by stride
    pred_ref: (ba_blk, R, s_blk) raw predictions; R = 5+nC, or 8 when aliased
    out_ref : (ba_blk, R, s_blk) decoded rows:
              [bx_px, by_px, bw_px, bh_px, sigmoid(conf), cls pass-through...]
    """
    p = pred_ref[...].astype(jnp.float32)

    # Transcendentals only on the 5 decoded rows; sliced lane-dense stores.
    out_ref[:, 0:2, :] = (jax.nn.sigmoid(p[:, 0:2, :]) * stride
                          + gxy_ref[...]).astype(out_ref.dtype)
    out_ref[:, 2:4, :] = (jnp.exp(p[:, 2:4, :]) * anch_ref[...]).astype(out_ref.dtype)
    out_ref[:, 4:5, :] = jax.nn.sigmoid(p[:, 4:5, :]).astype(out_ref.dtype)
    if out_ref.shape[1] > 5:
        # Class-logit rows present in this block are copied through unchanged.
        out_ref[:, 5:, :] = p[:, 5:, :].astype(out_ref.dtype)


def _divisors_desc(n):
    return [d for d in range(n, 0, -1) if n % d == 0]


def _choose_tiles(BA, S, rows, budget_bytes):
    """Largest (ba_blk, s_blk) — divisors of BA / S, lane-dense s — under budget."""

    def cost(ba_blk, s_blk):
        # double-buffered pred-in + out blocks, f32 (anchor/gxy blocks are tiny)
        return 2 * 2 * rows * ba_blk * s_blk * 4

    if cost(BA, S) <= budget_bytes:
        return BA, S                              # whole problem, single grid step
    s_divs = [s for s in _divisors_desc(S) if s % 128 == 0] or [S]
    best, best_cost = (1, s_divs[-1]), -1
    for s_blk in s_divs:
        for ba_blk in _divisors_desc(BA):
            c = cost(ba_blk, s_blk)
            if c <= budget_bytes:
                if c > best_cost:
                    best, best_cost = (ba_blk, s_blk), c
                break                             # largest ba_blk for this s_blk
    return best


def yolo_layer_forward(x, anchors, num_classes, img_dim, *, torch_layout=True):
    """Pallas implementation of YOLOLayer.forward(x, targets=None)."""
    nB, C, nGy, nGx = x.shape
    nA = len(anchors)
    bbox_attrs = 5 + num_classes
    assert C == nA * bbox_attrs
    stride = img_dim[0] / nGy
    S = nGy * nGx
    BA = nB * nA

    # (nB, nA*A, nGy, nGx) -> (nB*nA, A, S): contiguous reshape, native dtype.
    pred = x.reshape(BA, bbox_attrs, S)

    # Host-side constants with the stride folded in:
    #  * anchors in pixel units            -> wh = exp(p) * anchor_px
    #  * grid offsets pre-scaled by stride -> xy = sigmoid(p) * stride + gxy_px
    anch = jnp.tile(jnp.asarray(anchors, dtype=jnp.float32), (nB, 1)).reshape(BA, 2, 1)
    gx = jnp.tile(jnp.arange(nGx, dtype=jnp.float32), nGy)       # s -> s % nGx
    gy = jnp.repeat(jnp.arange(nGy, dtype=jnp.float32), nGx)     # s -> s // nGx
    gxy = (jnp.stack([gx, gy], axis=0) * stride).reshape(1, 2, S)

    # Real heads (A >= 8) with f32 input: alias the prediction buffer to the
    # output and only stream the first 8 rows through the kernel; rows 8..A-1
    # (class logits) stay untouched in the aliased buffer.
    alias_cls = bbox_attrs >= 8 and x.dtype == jnp.float32
    rows = 8 if alias_cls else bbox_attrs

    ba_blk, s_blk = _choose_tiles(BA, S, rows, _VMEM_BLOCK_BUDGET)
    grid = (BA // ba_blk, S // s_blk)

    out = pl.pallas_call(
        functools.partial(_yolo_kernel, stride=float(stride)),
        out_shape=jax.ShapeDtypeStruct((BA, bbox_attrs, S), jnp.float32),
        grid=grid,
        in_specs=[
            pl.BlockSpec((ba_blk, 2, 1), lambda i, j: (i, 0, 0)),        # anchors (px)
            pl.BlockSpec((1, 2, s_blk), lambda i, j: (0, 0, j)),         # grid offs (px)
            pl.BlockSpec((ba_blk, rows, s_blk), lambda i, j: (i, 0, j)),  # predictions
        ],
        out_specs=pl.BlockSpec((ba_blk, rows, s_blk), lambda i, j: (i, 0, j)),
        input_output_aliases=({2: 0} if alias_cls else {}),
        compiler_params=pltpu.CompilerParams(
            dimension_semantics=("parallel", "parallel"),
            vmem_limit_bytes=_VMEM_LIMIT_BYTES),
    )(anch, gxy, pred)

    if not torch_layout:
        # Lane-dense (nB*nA, bbox_attrs, S) layout — preferred for TPU consumers.
        return out
    # PyTorch layout (nB, nA*nGy*nGx, 5+nC).  NOTE: this makes the last dim
    # lane-sparse; use torch_layout=False when the consumer can avoid it.
    return out.reshape(nB, nA, bbox_attrs, S).transpose(0, 1, 3, 2).reshape(
        nB, nA * S, bbox_attrs)


def yolo_layer_reference(x, anchors, num_classes, img_dim):
    """Pure-JAX reference mirroring the PyTorch forward (inference path)."""
    nB, C, nGy, nGx = x.shape
    nA = len(anchors)
    A = 5 + num_classes
    stride = img_dim[0] / nGy
    pred = x.reshape(nB, nA, A, nGy, nGx).transpose(0, 1, 3, 4, 2)  # (nB,nA,nGy,nGx,A)
    sx = jax.nn.sigmoid(pred[..., 0])
    sy = jax.nn.sigmoid(pred[..., 1])
    w = pred[..., 2]
    h = pred[..., 3]
    conf = jax.nn.sigmoid(pred[..., 4])
    cls = pred[..., 5:]
    grid_x = jnp.arange(nGx, dtype=jnp.float32).reshape(1, 1, 1, nGx)
    grid_y = jnp.arange(nGy, dtype=jnp.float32).reshape(1, 1, nGy, 1)
    sa = jnp.asarray(anchors, dtype=jnp.float32) / stride
    aw = sa[:, 0].reshape(1, nA, 1, 1)
    ah = sa[:, 1].reshape(1, nA, 1, 1)
    boxes = jnp.stack(
        [sx + grid_x, sy + grid_y, jnp.exp(w) * aw, jnp.exp(h) * ah], axis=-1)
    return jnp.concatenate(
        [boxes.reshape(nB, -1, 4) * stride,
         conf.reshape(nB, -1, 1),
         cls.reshape(nB, -1, num_classes)], axis=-1)


if __name__ == "__main__":
    key = jax.random.PRNGKey(0)
    k1, k2 = jax.random.split(key)
    nA = len(ANCHORS)
    nB, nGy, nGx = 2, 16, 16
    img_dim = (256, 256)

    # Small head (nC=2 -> A=7): plain (non-aliased) path, single grid step.
    num_classes = 2
    x = jax.random.normal(k1, (nB, nA * (5 + num_classes), nGy, nGx),
                          dtype=jnp.float32)
    out = jax.block_until_ready(yolo_layer_forward(x, ANCHORS, num_classes, img_dim))
    ref = yolo_layer_reference(x, ANCHORS, num_classes, img_dim)
    assert out.shape == (nB, nA * nGy * nGx, 5 + num_classes), out.shape
    np.testing.assert_allclose(np.asarray(out), np.asarray(ref), rtol=1e-5, atol=1e-4)

    # Realistic head (nC=80 -> A=85): exercises the aliased class pass-through.
    num_classes2 = 80
    x2 = jax.random.normal(k2, (nB, nA * (5 + num_classes2), nGy, nGx),
                           dtype=jnp.float32)
    out2 = jax.block_until_ready(yolo_layer_forward(x2, ANCHORS, num_classes2, img_dim))
    ref2 = yolo_layer_reference(x2, ANCHORS, num_classes2, img_dim)
    assert out2.shape == (nB, nA * nGy * nGx, 5 + num_classes2), out2.shape
    np.testing.assert_allclose(np.asarray(out2), np.asarray(ref2), rtol=1e-5, atol=1e-4)

    print("KERNEL_OK")
</pallas_src>

<mosaic_0001>
module attributes {stable_mosaic.version = 11 : i64} {
  func.func @_yolo_kernel(%arg0: i32, %arg1: i32, %arg2: memref<12x2x1xf32, #tpu.memory_space<vmem>>, %arg3: memref<1x2x256xf32, #tpu.memory_space<vmem>>, %arg4: memref<12x7x256xf32, #tpu.memory_space<vmem>>, %arg5: memref<12x7x256xf32, #tpu.memory_space<vmem>>) attributes {dimension_semantics = [#tpu.dimension_semantics<parallel>, #tpu.dimension_semantics<parallel>], iteration_bounds = array<i64: 1, 1>, scalar_prefetch = 0 : i64, scratch_operands = 0 : i64, tpu.core_type = #tpu.core_type<tc>, window_params = [{transform_indices = @transform_0, window_bounds = array<i64: 12, 2, 1>}, {transform_indices = @transform_1, window_bounds = array<i64: 1, 2, 256>}, {transform_indices = @transform_2, window_bounds = array<i64: 12, 7, 256>}, {transform_indices = @transform_3, window_bounds = array<i64: 12, 7, 256>}]} {
    %c0 = arith.constant 0 : index
    %c0_0 = arith.constant 0 : index
    %c0_1 = arith.constant 0 : index
    %0 = vector.load %arg4[%c0, %c0_0, %c0_1] : memref<12x7x256xf32, #tpu.memory_space<vmem>>, vector<12x7x256xf32>
    %1 = vector.extract_strided_slice %0 {offsets = [0, 0, 0], sizes = [12, 2, 256], strides = [1, 1, 1]} : vector<12x7x256xf32> to vector<12x2x256xf32>
    %2 = arith.negf %1 : vector<12x2x256xf32>
    %3 = math.exp %2 : vector<12x2x256xf32>
    %cst = arith.constant 1.000000e+00 : f32
    %4 = vector.broadcast %cst : f32 to vector<12x2x256xf32>
    %5 = arith.addf %4, %3 : vector<12x2x256xf32>
    %6 = arith.divf %4, %5 : vector<12x2x256xf32>
    %cst_2 = arith.constant 1.600000e+01 : f32
    %7 = vector.broadcast %cst_2 : f32 to vector<12x2x256xf32>
    %8 = arith.mulf %6, %7 : vector<12x2x256xf32>
    %c0_3 = arith.constant 0 : index
    %c0_4 = arith.constant 0 : index
    %c0_5 = arith.constant 0 : index
    %9 = vector.load %arg3[%c0_3, %c0_4, %c0_5] : memref<1x2x256xf32, #tpu.memory_space<vmem>>, vector<1x2x256xf32>
    %10 = vector.broadcast %9 : vector<1x2x256xf32> to vector<12x2x256xf32>
    %11 = arith.addf %8, %10 : vector<12x2x256xf32>
    %c0_6 = arith.constant 0 : index
    %c0_7 = arith.constant 0 : index
    %c0_8 = arith.constant 0 : index
    %12 = vector.load %arg5[%c0_6, %c0_7, %c0_8] : memref<12x7x256xf32, #tpu.memory_space<vmem>>, vector<12x2x256xf32>
    tpu.vector_store %arg5[%c0_6, %c0_7, %c0_8], %11 {strides = array<i32>} : memref<12x7x256xf32, #tpu.memory_space<vmem>>, vector<12x2x256xf32>,
    %13 = vector.extract_strided_slice %0 {offsets = [0, 2, 0], sizes = [12, 2, 256], strides = [1, 1, 1]} : vector<12x7x256xf32> to vector<12x2x256xf32>
    %14 = math.exp %13 : vector<12x2x256xf32>
    %c0_9 = arith.constant 0 : index
    %c0_10 = arith.constant 0 : index
    %c0_11 = arith.constant 0 : index
    %15 = vector.load %arg2[%c0_9, %c0_10, %c0_11] : memref<12x2x1xf32, #tpu.memory_space<vmem>>, vector<12x2x1xf32>
    %16 = vector.broadcast %15 : vector<12x2x1xf32> to vector<12x2x256xf32>
    %17 = arith.mulf %14, %16 : vector<12x2x256xf32>
    %c0_12 = arith.constant 0 : index
    %c2 = arith.constant 2 : index
    %c0_13 = arith.constant 0 : index
    %18 = vector.load %arg5[%c0_12, %c2, %c0_13] : memref<12x7x256xf32, #tpu.memory_space<vmem>>, vector<12x2x256xf32>
    tpu.vector_store %arg5[%c0_12, %c2, %c0_13], %17 {strides = array<i32>} : memref<12x7x256xf32, #tpu.memory_space<vmem>>, vector<12x2x256xf32>,
    %19 = vector.extract_strided_slice %0 {offsets = [0, 4, 0], sizes = [12, 1, 256], strides = [1, 1, 1]} : vector<12x7x256xf32> to vector<12x1x256xf32>
    %20 = arith.negf %19 : vector<12x1x256xf32>
    %21 = math.exp %20 : vector<12x1x256xf32>
    %cst_14 = arith.constant 1.000000e+00 : f32
    %22 = vector.broadcast %cst_14 : f32 to vector<12x1x256xf32>
    %23 = arith.addf %22, %21 : vector<12x1x256xf32>
    %24 = arith.divf %22, %23 : vector<12x1x256xf32>
    %c0_15 = arith.constant 0 : index
    %c4 = arith.constant 4 : index
    %c0_16 = arith.constant 0 : index
    %25 = vector.load %arg5[%c0_15, %c4, %c0_16] : memref<12x7x256xf32, #tpu.memory_space<vmem>>, vector<12x1x256xf32>
    tpu.vector_store %arg5[%c0_15, %c4, %c0_16], %24 {strides = array<i32>} : memref<12x7x256xf32, #tpu.memory_space<vmem>>, vector<12x1x256xf32>,
    %26 = vector.extract_strided_slice %0 {offsets = [0, 5, 0], sizes = [12, 2, 256], strides = [1, 1, 1]} : vector<12x7x256xf32> to vector<12x2x256xf32>
    %c0_17 = arith.constant 0 : index
    %c5 = arith.constant 5 : index
    %c0_18 = arith.constant 0 : index
    %27 = vector.load %arg5[%c0_17, %c5, %c0_18] : memref<12x7x256xf32, #tpu.memory_space<vmem>>, vector<12x2x256xf32>
    tpu.vector_store %arg5[%c0_17, %c5, %c0_18], %26 {strides = array<i32>} : memref<12x7x256xf32, #tpu.memory_space<vmem>>, vector<12x2x256xf32>,
    return
  }
  func.func @transform_0(%arg0: i32, %arg1: i32) -> (i32, i32, i32) {
    %c0_i32 = arith.constant 0 : i32
    %c0_i32_0 = arith.constant 0 : i32
    %c0_i32_1 = arith.constant 0 : i32
    return %arg0, %c0_i32, %c0_i32_0 : i32, i32, i32
  }
  func.func @transform_1(%arg0: i32, %arg1: i32) -> (i32, i32, i32) {
    %c0_i32 = arith.constant 0 : i32
    %c0_i32_0 = arith.constant 0 : i32
    %c0_i32_1 = arith.constant 0 : i32
    return %c0_i32, %c0_i32_0, %arg1 : i32, i32, i32
  }
  func.func @transform_2(%arg0: i32, %arg1: i32) -> (i32, i32, i32) {
    %c0_i32 = arith.constant 0 : i32
    %c0_i32_0 = arith.constant 0 : i32
    return %arg0, %c0_i32, %arg1 : i32, i32, i32
  }
  func.func @transform_3(%arg0: i32, %arg1: i32) -> (i32, i32, i32) {
    %c0_i32 = arith.constant 0 : i32
    %c0_i32_0 = arith.constant 0 : i32
    return %arg0, %c0_i32, %arg1 : i32, i32, i32
  }
}

</mosaic_0001>

<llo_original>
// kernel: tpu_custom_call.1
$region0: #{tpu_custom_call.1}
  #allocation0 [shape = 'u32[]', space=smem, size = 0x4, offset = 0x4, fixed_abs, tag = 'smem constant byte address 0x4 - core index']
  #allocation1 [shape = 'u32[144,128]{1,0:T(1,128)}', space=vmem, size = 0x12000, scoped, tag = 'internal scratch']
  %s0 = inlined_call_operand.vmem [shape: f32[12,2,1], index: 0, kind: input, shape index: {}]
  %s1 = inlined_call_operand.vmem [shape: f32[1,2,256], index: 1, kind: input, shape index: {}]
  %s2 = inlined_call_operand.hbm [shape: f32[12,7,256], index: 2, kind: input, shape index: {}]
  %s3 = inlined_call_operand.hbm [shape: f32[12,7,256], index: 3, kind: output, shape index: {}]
  %s4 = sld [smem:[#allocation0]]
  $region26: #{tpu_custom_call.1} parent=0
    _
  %s6 = ssub.s32 1, %s4
  %s7 = scalar_select 0, %s6, %s4
  $region1: #{tpu_custom_call.1} parent=0
    #allocation2 [shape = 'u8[98304]{0}', space=vmem, size = 0x18000, scoped, tag = 'input window, operand 2, single buffered']
    #allocation3 [shape = 's32[1]{0}', space=sflag, size = 0x4, scoped, tag = 'scoped memory for tpu_custom_call.1']
    #allocation4 [shape = 's32[1]{0}', space=sflag, size = 0x4, scoped, tag = 'scoped memory for tpu_custom_call.1']
    #allocation5 [shape = 'u8[98304]{0}', space=vmem, size = 0x18000, scoped, tag = 'output window, operand 0, single buffered']
    %8 = vsyncpa [#allocation3], 0
    %9 = vsyncpa [#allocation4], 0
    // Predicated region
    $region2: #{tpu_custom_call.1} parent=1 // pred_check
      _
    $region3: #{tpu_custom_call.1} parent=1 // pred_check_branch
      %11 = sbr.rel (0) target = $region5
    $region4: #{tpu_custom_call.1} parent=1 // pred_region
      _
    $region5: #{tpu_custom_call.1} parent=1 // pred_fallthru
      _
    // Predicated region
    $region6: #{tpu_custom_call.1} parent=1 // pred_check
      _
    $region7: #{tpu_custom_call.1} parent=1 // pred_check_branch
      %13 = sbr.rel (0) target = $region9
    $region8: #{tpu_custom_call.1} parent=1 // pred_region
      _
    $region9: #{tpu_custom_call.1} parent=1 // pred_fallthru
      _
    // Predicated region
    $region10: #{tpu_custom_call.1} parent=1 // pred_check
      _
    $region11: #{tpu_custom_call.1} parent=1 // pred_check_branch
      %15 = sbr.rel (0) target = $region13
    $region12: #{tpu_custom_call.1} parent=1 // pred_region
      %s17 = ssub.s32 3072, 3072
      %18 = vsyncadd [#allocation3], %s17
      %s19 = sshll.u32 [#allocation2], 4
      %s20 = int_to_ptr.vmem [resolvable:$true] %s19
      %25 = dma.hbm_to_vmem [thread:$0]  %s2, 3072, %s20, [#allocation3], 256, 256, 16
    $region13: #{tpu_custom_call.1} parent=1 // pred_fallthru
      _
    // Predicated region
    $region14: #{tpu_custom_call.1} parent=1 // pred_check
      _
    $region15: #{tpu_custom_call.1} parent=1 // pred_check_branch
      %27 = sbr.rel (0) target = $region17
    $region16: #{tpu_custom_call.1} parent=1 // pred_region
      %28 = dma.done [#allocation3], 3072
    $region17: #{tpu_custom_call.1} parent=1 // pred_fallthru
      _
    %v29 = vld [vmem:[#allocation2] sm:$0x7f]
    %v30 = vld [vmem:[#allocation2 + $0x8] sm:$0x7f]
    %v31 = vld [vmem:[#allocation2 + $0x10] sm:$0x7f]
    %v32 = vld [vmem:[#allocation2 + $0x18] sm:$0x7f]
    %v33 = vld [vmem:[#allocation2 + $0x20] sm:$0x7f]
    %v34 = vld [vmem:[#allocation2 + $0x28] sm:$0x7f]
    %v35 = vld [vmem:[#allocation2 + $0x30] sm:$0x7f]
    %v36 = vld [vmem:[#allocation2 + $0x38] sm:$0x7f]
    %v37 = vld [vmem:[#allocation2 + $0x40] sm:$0x7f]
    %v38 = vld [vmem:[#allocation2 + $0x48] sm:$0x7f]
    %v39 = vld [vmem:[#allocation2 + $0x50] sm:$0x7f]
    %v40 = vld [vmem:[#allocation2 + $0x58] sm:$0x7f]
    %v41 = vld [vmem:[#allocation2 + $0x60] sm:$0x7f]
    %v42 = vld [vmem:[#allocation2 + $0x68] sm:$0x7f]
    %v43 = vld [vmem:[#allocation2 + $0x70] sm:$0x7f]
    %v44 = vld [vmem:[#allocation2 + $0x78] sm:$0x7f]
    %v45 = vld [vmem:[#allocation2 + $0x80] sm:$0x7f]
    %v46 = vld [vmem:[#allocation2 + $0x88] sm:$0x7f]
    %v47 = vld [vmem:[#allocation2 + $0x90] sm:$0x7f]
    %v48 = vld [vmem:[#allocation2 + $0x98] sm:$0x7f]
    %v49 = vld [vmem:[#allocation2 + $0xa0] sm:$0x7f]
    %v50 = vld [vmem:[#allocation2 + $0xa8] sm:$0x7f]
    %v51 = vld [vmem:[#allocation2 + $0xb0] sm:$0x7f]
    %v52 = vld [vmem:[#allocation2 + $0xb8] sm:$0x7f]
    %v53 = vxor.u32 %v29, 2147483648
    %v54 = vxor.u32 %v30, 2147483648
    %v55 = vxor.u32 %v31, 2147483648
    %v56 = vxor.u32 %v32, 2147483648
    %v57 = vxor.u32 %v33, 2147483648
    %v58 = vxor.u32 %v34, 2147483648
    %v59 = vxor.u32 %v35, 2147483648
    %v60 = vxor.u32 %v36, 2147483648
    %v61 = vxor.u32 %v37, 2147483648
    %v62 = vxor.u32 %v38, 2147483648
    %v63 = vxor.u32 %v39, 2147483648
    %v64 = vxor.u32 %v40, 2147483648
    %v65 = vxor.u32 %v41, 2147483648
    %v66 = vxor.u32 %v42, 2147483648
    %v67 = vxor.u32 %v43, 2147483648
    %v68 = vxor.u32 %v44, 2147483648
    %v69 = vxor.u32 %v45, 2147483648
    %v70 = vxor.u32 %v46, 2147483648
    %v71 = vxor.u32 %v47, 2147483648
    %v72 = vxor.u32 %v48, 2147483648
    %v73 = vxor.u32 %v49, 2147483648
    %v74 = vxor.u32 %v50, 2147483648
    %v75 = vxor.u32 %v51, 2147483648
    %v76 = vxor.u32 %v52, 2147483648
    %v77 = vmul.f32 %v53, 1.442695
    %v78 = vpow.pop %v77
    %v79 = vmul.f32 %v54, 1.442695
    %v80 = vpow.pop %v79
    %v81 = vmul.f32 %v55, 1.442695
    %v82 = vpow.pop %v81
    %v83 = vmul.f32 %v56, 1.442695
    %v84 = vpow.pop %v83
    %v85 = vmul.f32 %v57, 1.442695
    %v86 = vpow.pop %v85
    %v87 = vmul.f32 %v58, 1.442695
    %v88 = vpow.pop %v87
    %v89 = vmul.f32 %v59, 1.442695
    %v90 = vpow.pop %v89
    %v91 = vmul.f32 %v60, 1.442695
    %v92 = vpow.pop %v91
    %v93 = vmul.f32 %v61, 1.442695
    %v94 = vpow.pop %v93
    %v95 = vmul.f32 %v62, 1.442695
    %v96 = vpow.pop %v95
    %v97 = vmul.f32 %v63, 1.442695
    %v98 = vpow.pop %v97
    %v99 = vmul.f32 %v64, 1.442695
    %v100 = vpow.pop %v99
    %v101 = vmul.f32 %v65, 1.442695
    %v102 = vpow.pop %v101
    %v103 = vmul.f32 %v66, 1.442695
    %v104 = vpow.pop %v103
    %v105 = vmul.f32 %v67, 1.442695
    %v106 = vpow.pop %v105
    %v107 = vmul.f32 %v68, 1.442695
    %v108 = vpow.pop %v107
    %v109 = vmul.f32 %v69, 1.442695
    %v110 = vpow.pop %v109
    %v111 = vmul.f32 %v70, 1.442695
    %v112 = vpow.pop %v111
    %v113 = vmul.f32 %v71, 1.442695
    %v114 = vpow.pop %v113
    %v115 = vmul.f32 %v72, 1.442695
    %v116 = vpow.pop %v115
    %v117 = vmul.f32 %v73, 1.442695
    %v118 = vpow.pop %v117
    %v119 = vmul.f32 %v74, 1.442695
    %v120 = vpow.pop %v119
    %v121 = vmul.f32 %v75, 1.442695
    %v122 = vpow.pop %v121
    %v123 = vmul.f32 %v76, 1.442695
    %v124 = vpow.pop %v123
    %v125 = vadd.f32 %v78, 1.0
    %v126 = vadd.f32 %v80, 1.0
    %v127 = vadd.f32 %v82, 1.0
    %v128 = vadd.f32 %v84, 1.0
    %v129 = vadd.f32 %v86, 1.0
    %v130 = vadd.f32 %v88, 1.0
    %v131 = vadd.f32 %v90, 1.0
    %v132 = vadd.f32 %v92, 1.0
    %v133 = vadd.f32 %v94, 1.0
    %v134 = vadd.f32 %v96, 1.0
    %v135 = vadd.f32 %v98, 1.0
    %v136 = vadd.f32 %v100, 1.0
    %v137 = vadd.f32 %v102, 1.0
    %v138 = vadd.f32 %v104, 1.0
    %v139 = vadd.f32 %v106, 1.0
    %v140 = vadd.f32 %v108, 1.0
    %v141 = vadd.f32 %v110, 1.0
    %v142 = vadd.f32 %v112, 1.0
    %v143 = vadd.f32 %v114, 1.0
    %v144 = vadd.f32 %v116, 1.0
    %v145 = vadd.f32 %v118, 1.0
    %v146 = vadd.f32 %v120, 1.0
    %v147 = vadd.f32 %v122, 1.0
    %v148 = vadd.f32 %v124, 1.0
    %v149 = vrcp.pop %v125
    %v150 = vmul.f32 1.0, %v149
    %v151 = vrcp.pop %v126
    %v152 = vmul.f32 1.0, %v151
    %v153 = vrcp.pop %v127
    %v154 = vmul.f32 1.0, %v153
    %v155 = vrcp.pop %v128
    %v156 = vmul.f32 1.0, %v155
    %v157 = vrcp.pop %v129
    %v158 = vmul.f32 1.0, %v157
    %v159 = vrcp.pop %v130
    %v160 = vmul.f32 1.0, %v159
    %v161 = vrcp.pop %v131
    %v162 = vmul.f32 1.0, %v161
    %v163 = vrcp.pop %v132
    %v164 = vmul.f32 1.0, %v163
    %v165 = vrcp.pop %v133
    %v166 = vmul.f32 1.0, %v165
    %v167 = vrcp.pop %v134
    %v168 = vmul.f32 1.0, %v167
    %v169 = vrcp.pop %v135
    %v170 = vmul.f32 1.0, %v169
    %v171 = vrcp.pop %v136
    %v172 = vmul.f32 1.0, %v171
    %v173 = vrcp.pop %v137
    %v174 = vmul.f32 1.0, %v173
    %v175 = vrcp.pop %v138
    %v176 = vmul.f32 1.0, %v175
    %v177 = vrcp.pop %v139
    %v178 = vmul.f32 1.0, %v177
    %v179 = vrcp.pop %v140
    %v180 = vmul.f32 1.0, %v179
    %v181 = vrcp.pop %v141
    %v182 = vmul.f32 1.0, %v181
    %v183 = vrcp.pop %v142
    %v184 = vmul.f32 1.0, %v183
    %v185 = vrcp.pop %v143
    %v186 = vmul.f32 1.0, %v185
    %v187 = vrcp.pop %v144
    %v188 = vmul.f32 1.0, %v187
    %v189 = vrcp.pop %v145
    %v190 = vmul.f32 1.0, %v189
    %v191 = vrcp.pop %v146
    %v192 = vmul.f32 1.0, %v191
    %v193 = vrcp.pop %v147
    %v194 = vmul.f32 1.0, %v193
    %v195 = vrcp.pop %v148
    %v196 = vmul.f32 1.0, %v195
    %v197 = vmul.f32 %v150, 16.0
    %v198 = vmul.f32 %v152, 16.0
    %v199 = vmul.f32 %v154, 16.0
    %v200 = vmul.f32 %v156, 16.0
    %v201 = vmul.f32 %v158, 16.0
    %v202 = vmul.f32 %v160, 16.0
    %v203 = vmul.f32 %v162, 16.0
    %v204 = vmul.f32 %v164, 16.0
    %v205 = vmul.f32 %v166, 16.0
    %v206 = vmul.f32 %v168, 16.0
    %v207 = vmul.f32 %v170, 16.0
    %v208 = vmul.f32 %v172, 16.0
    %v209 = vmul.f32 %v174, 16.0
    %v210 = vmul.f32 %v176, 16.0
    %v211 = vmul.f32 %v178, 16.0
    %v212 = vmul.f32 %v180, 16.0
    %v213 = vmul.f32 %v182, 16.0
    %v214 = vmul.f32 %v184, 16.0
    %v215 = vmul.f32 %v186, 16.0
    %v216 = vmul.f32 %v188, 16.0
    %v217 = vmul.f32 %v190, 16.0
    %v218 = vmul.f32 %v192, 16.0
    %v219 = vmul.f32 %v194, 16.0
    %v220 = vmul.f32 %v196, 16.0
    %v221 = vld [vmem:[%s1] sm:$0xf]
    %v224 = vunpack.c.l.s4 1983009808
    %v225 = vunpack.c.0.s8 %v224
    %v226 = vlaneseq
    %v227 = vshrl.u32 %v226, 7
    %v228 = vsub.s32 %v225, %v227
    %v229 = vrot.slane %v221, %v228
    %v230 = vcombine.high %v229, %v229
    %v233 = vadd.f32 %v197, %v229
    %v234 = vadd.f32 %v198, %v230
    %v235 = vadd.f32 %v199, %v229
    %v236 = vadd.f32 %v200, %v230
    %v237 = vadd.f32 %v201, %v229
    %v238 = vadd.f32 %v202, %v230
    %v239 = vadd.f32 %v203, %v229
    %v240 = vadd.f32 %v204, %v230
    %v241 = vadd.f32 %v205, %v229
    %v242 = vadd.f32 %v206, %v230
    %v243 = vadd.f32 %v207, %v229
    %v244 = vadd.f32 %v208, %v230
    %v245 = vadd.f32 %v209, %v229
    %v246 = vadd.f32 %v210, %v230
    %v247 = vadd.f32 %v211, %v229
    %v248 = vadd.f32 %v212, %v230
    %v249 = vadd.f32 %v213, %v229
    %v250 = vadd.f32 %v214, %v230
    %v251 = vadd.f32 %v215, %v229
    %v252 = vadd.f32 %v216, %v230
    %v253 = vadd.f32 %v217, %v229
    %v254 = vadd.f32 %v218, %v230
    %v255 = vadd.f32 %v219, %v229
    %v256 = vadd.f32 %v220, %v230
    %257 = vst [vmem:[#allocation5] sm:$0x3] %v233
    %258 = vst [vmem:[#allocation5 + $0x8] sm:$0x3] %v234
    %259 = vst [vmem:[#allocation5 + $0x10] sm:$0x3] %v235
    %260 = vst [vmem:[#allocation5 + $0x18] sm:$0x3] %v236
    %261 = vst [vmem:[#allocation5 + $0x20] sm:$0x3] %v237
    %262 = vst [vmem:[#allocation5 + $0x28] sm:$0x3] %v238
    %263 = vst [vmem:[#allocation5 + $0x30] sm:$0x3] %v239
    %264 = vst [vmem:[#allocation5 + $0x38] sm:$0x3] %v240
    %265 = vst [vmem:[#allocation5 + $0x40] sm:$0x3] %v241
    %266 = vst [vmem:[#allocation5 + $0x48] sm:$0x3] %v242
    %267 = vst [vmem:[#allocation5 + $0x50] sm:$0x3] %v243
    %268 = vst [vmem:[#allocation5 + $0x58] sm:$0x3] %v244
    %269 = vst [vmem:[#allocation5 + $0x60] sm:$0x3] %v245
    %270 = vst [vmem:[#allocation5 + $0x68] sm:$0x3] %v246
    %271 = vst [vmem:[#allocation5 + $0x70] sm:$0x3] %v247
    %272 = vst [vmem:[#allocation5 + $0x78] sm:$0x3] %v248
    %273 = vst [vmem:[#allocation5 + $0x80] sm:$0x3] %v249
    %274 = vst [vmem:[#allocation5 + $0x88] sm:$0x3] %v250
    %275 = vst [vmem:[#allocation5 + $0x90] sm:$0x3] %v251
    %276 = vst [vmem:[#allocation5 + $0x98] sm:$0x3] %v252
    %277 = vst [vmem:[#allocation5 + $0xa0] sm:$0x3] %v253
    %278 = vst [vmem:[#allocation5 + $0xa8] sm:$0x3] %v254
    %279 = vst [vmem:[#allocation5 + $0xb0] sm:$0x3] %v255
    %280 = vst [vmem:[#allocation5 + $0xb8] sm:$0x3] %v256
    %v281 = vmul.f32 %v29, 1.442695
    %v282 = vpow.pop %v281
    %v283 = vmul.f32 %v30, 1.442695
    %v284 = vpow.pop %v283
    %v285 = vmul.f32 %v31, 1.442695
    %v286 = vpow.pop %v285
    %v287 = vmul.f32 %v32, 1.442695
    %v288 = vpow.pop %v287
    %v289 = vmul.f32 %v33, 1.442695
    %v290 = vpow.pop %v289
    %v291 = vmul.f32 %v34, 1.442695
    %v292 = vpow.pop %v291
    %v293 = vmul.f32 %v35, 1.442695
    %v294 = vpow.pop %v293
    %v295 = vmul.f32 %v36, 1.442695
    %v296 = vpow.pop %v295
    %v297 = vmul.f32 %v37, 1.442695
    %v298 = vpow.pop %v297
    %v299 = vmul.f32 %v38, 1.442695
    %v300 = vpow.pop %v299
    %v301 = vmul.f32 %v39, 1.442695
    %v302 = vpow.pop %v301
    %v303 = vmul.f32 %v40, 1.442695
    %v304 = vpow.pop %v303
    %v305 = vmul.f32 %v41, 1.442695
    %v306 = vpow.pop %v305
    %v307 = vmul.f32 %v42, 1.442695
    %v308 = vpow.pop %v307
    %v309 = vmul.f32 %v43, 1.442695
    %v310 = vpow.pop %v309
    %v311 = vmul.f32 %v44, 1.442695
    %v312 = vpow.pop %v311
    %v313 = vmul.f32 %v45, 1.442695
    %v314 = vpow.pop %v313
    %v315 = vmul.f32 %v46, 1.442695
    %v316 = vpow.pop %v315
    %v317 = vmul.f32 %v47, 1.442695
    %v318 = vpow.pop %v317
    %v319 = vmul.f32 %v48, 1.442695
    %v320 = vpow.pop %v319
    %v321 = vmul.f32 %v49, 1.442695
    %v322 = vpow.pop %v321
    %v323 = vmul.f32 %v50, 1.442695
    %v324 = vpow.pop %v323
    %v325 = vmul.f32 %v51, 1.442695
    %v326 = vpow.pop %v325
    %v327 = vmul.f32 %v52, 1.442695
    %v328 = vpow.pop %v327
    %v329 = vld [vmem:[%s0] sm:$0x3]
    %v330 = vld [vmem:[%s0 + $0x2] sm:$0x3]
    %v331 = vld [vmem:[%s0 + $0x4] sm:$0x3]
    %v332 = vld [vmem:[%s0 + $0x6] sm:$0x3]
    %v333 = vld [vmem:[%s0 + $0x8] sm:$0x3]
    %v334 = vld [vmem:[%s0 + $0xa] sm:$0x3]
    %v335 = vld [vmem:[%s0 + $0xc] sm:$0x3]
    %v336 = vld [vmem:[%s0 + $0xe] sm:$0x3]
    %v337 = vld [vmem:[%s0 + $0x10] sm:$0x3]
    %v338 = vld [vmem:[%s0 + $0x12] sm:$0x3]
    %v339 = vld [vmem:[%s0 + $0x14] sm:$0x3]
    %v340 = vld [vmem:[%s0 + $0x16] sm:$0x3]
    %342 = vset.pattern.permute.xlu0 0
    %343 = vperm.xlu0 %342, %v329
    %v344 = vpop.permute.xlu0 %343
    %346 = vset.pattern.permute.xlu0 0
    %347 = vperm.xlu0 %346, %v330
    %v348 = vpop.permute.xlu0 %347
    %350 = vset.pattern.permute.xlu0 0
    %351 = vperm.xlu0 %350, %v331
    %v352 = vpop.permute.xlu0 %351
    %354 = vset.pattern.permute.xlu0 0
    %355 = vperm.xlu0 %354, %v332
    %v356 = vpop.permute.xlu0 %355
    %358 = vset.pattern.permute.xlu0 0
    %359 = vperm.xlu0 %358, %v333
    %v360 = vpop.permute.xlu0 %359
    %362 = vset.pattern.permute.xlu0 0
    %363 = vperm.xlu0 %362, %v334
    %v364 = vpop.permute.xlu0 %363
    %366 = vset.pattern.permute.xlu0 0
    %367 = vperm.xlu0 %366, %v335
    %v368 = vpop.permute.xlu0 %367
    %370 = vset.pattern.permute.xlu0 0
    %371 = vperm.xlu0 %370, %v336
    %v372 = vpop.permute.xlu0 %371
    %374 = vset.pattern.permute.xlu0 0
    %375 = vperm.xlu0 %374, %v337
    %v376 = vpop.permute.xlu0 %375
    %378 = vset.pattern.permute.xlu0 0
    %379 = vperm.xlu0 %378, %v338
    %v380 = vpop.permute.xlu0 %379
    %382 = vset.pattern.permute.xlu0 0
    %383 = vperm.xlu0 %382, %v339
    %v384 = vpop.permute.xlu0 %383
    %386 = vset.pattern.permute.xlu0 0
    %387 = vperm.xlu0 %386, %v340
    %v388 = vpop.permute.xlu0 %387
    %v389 = vrot.slane %v344, 6
    %v390 = vrot.slane %v348, 6
    %v391 = vrot.slane %v352, 6
    %v392 = vrot.slane %v356, 6
    %v393 = vrot.slane %v360, 6
    %v394 = vrot.slane %v364, 6
    %v395 = vrot.slane %v368, 6
    %v396 = vrot.slane %v372, 6
    %v397 = vrot.slane %v376, 6
    %v398 = vrot.slane %v380, 6
    %v399 = vrot.slane %v384, 6
    %v400 = vrot.slane %v388, 6
    %v413 = vmul.f32 %v282, %v389
    %v414 = vmul.f32 %v284, %v389
    %v415 = vmul.f32 %v286, %v390
    %v416 = vmul.f32 %v288, %v390
    %v417 = vmul.f32 %v290, %v391
    %v418 = vmul.f32 %v292, %v391
    %v419 = vmul.f32 %v294, %v392
    %v420 = vmul.f32 %v296, %v392
    %v421 = vmul.f32 %v298, %v393
    %v422 = vmul.f32 %v300, %v393
    %v423 = vmul.f32 %v302, %v394
    %v424 = vmul.f32 %v304, %v394
    %v425 = vmul.f32 %v306, %v395
    %v426 = vmul.f32 %v308, %v395
    %v427 = vmul.f32 %v310, %v396
    %v428 = vmul.f32 %v312, %v396
    %v429 = vmul.f32 %v314, %v397
    %v430 = vmul.f32 %v316, %v397
    %v431 = vmul.f32 %v318, %v398
    %v432 = vmul.f32 %v320, %v398
    %v433 = vmul.f32 %v322, %v399
    %v434 = vmul.f32 %v324, %v399
    %v435 = vmul.f32 %v326, %v400
    %v436 = vmul.f32 %v328, %v400
    %437 = vst [vmem:[#allocation5] sm:$0xc] %v413
    %438 = vst [vmem:[#allocation5 + $0x8] sm:$0xc] %v414
    %439 = vst [vmem:[#allocation5 + $0x10] sm:$0xc] %v415
    %440 = vst [vmem:[#allocation5 + $0x18] sm:$0xc] %v416
    %441 = vst [vmem:[#allocation5 + $0x20] sm:$0xc] %v417
    %442 = vst [vmem:[#allocation5 + $0x28] sm:$0xc] %v418
    %443 = vst [vmem:[#allocation5 + $0x30] sm:$0xc] %v419
    %444 = vst [vmem:[#allocation5 + $0x38] sm:$0xc] %v420
    %445 = vst [vmem:[#allocation5 + $0x40] sm:$0xc] %v421
    %446 = vst [vmem:[#allocation5 + $0x48] sm:$0xc] %v422
    %447 = vst [vmem:[#allocation5 + $0x50] sm:$0xc] %v423
    %448 = vst [vmem:[#allocation5 + $0x58] sm:$0xc] %v424
    %449 = vst [vmem:[#allocation5 + $0x60] sm:$0xc] %v425
    %450 = vst [vmem:[#allocation5 + $0x68] sm:$0xc] %v426
    %451 = vst [vmem:[#allocation5 + $0x70] sm:$0xc] %v427
    %452 = vst [vmem:[#allocation5 + $0x78] sm:$0xc] %v428
    %453 = vst [vmem:[#allocation5 + $0x80] sm:$0xc] %v429
    %454 = vst [vmem:[#allocation5 + $0x88] sm:$0xc] %v430
    %455 = vst [vmem:[#allocation5 + $0x90] sm:$0xc] %v431
    %456 = vst [vmem:[#allocation5 + $0x98] sm:$0xc] %v432
    %457 = vst [vmem:[#allocation5 + $0xa0] sm:$0xc] %v433
    %458 = vst [vmem:[#allocation5 + $0xa8] sm:$0xc] %v434
    %459 = vst [vmem:[#allocation5 + $0xb0] sm:$0xc] %v435
    %460 = vst [vmem:[#allocation5 + $0xb8] sm:$0xc] %v436
    %v485 = vcombine.high %v150, %v152
    %v487 = vunpack.c.l.s4 1966171168
    %v488 = vunpack.c.0.s8 %v487
    %v489 = vlaneseq
    %v490 = vshrl.u32 %v489, 7
    %v491 = vsub.s32 %v488, %v490
    %v492 = vrot.slane %v485, %v491
    %v494 = vunpack.c.l.s4 1966171168
    %v495 = vunpack.c.0.s8 %v494
    %v496 = vlaneseq
    %v497 = vshrl.u32 %v496, 7
    %v498 = vsub.s32 %v495, %v497
    %v499 = vrot.slane %v492, %v498
    %v500 = vcombine.high %v154, %v156
    %v502 = vunpack.c.l.s4 1966171168
    %v503 = vunpack.c.0.s8 %v502
    %v504 = vlaneseq
    %v505 = vshrl.u32 %v504, 7
    %v506 = vsub.s32 %v503, %v505
    %v507 = vrot.slane %v500, %v506
    %v509 = vunpack.c.l.s4 1966171168
    %v510 = vunpack.c.0.s8 %v509
    %v511 = vlaneseq
    %v512 = vshrl.u32 %v511, 7
    %v513 = vsub.s32 %v510, %v512
    %v514 = vrot.slane %v507, %v513
    %v515 = vcombine.high %v158, %v160
    %v517 = vunpack.c.l.s4 1966171168
    %v518 = vunpack.c.0.s8 %v517
    %v519 = vlaneseq
    %v520 = vshrl.u32 %v519, 7
    %v521 = vsub.s32 %v518, %v520
    %v522 = vrot.slane %v515, %v521
    %v524 = vunpack.c.l.s4 1966171168
    %v525 = vunpack.c.0.s8 %v524
    %v526 = vlaneseq
    %v527 = vshrl.u32 %v526, 7
    %v528 = vsub.s32 %v525, %v527
    %v529 = vrot.slane %v522, %v528
    %v530 = vcombine.high %v162, %v164
    %v532 = vunpack.c.l.s4 1966171168
    %v533 = vunpack.c.0.s8 %v532
    %v534 = vlaneseq
    %v535 = vshrl.u32 %v534, 7
    %v536 = vsub.s32 %v533, %v535
    %v537 = vrot.slane %v530, %v536
    %v539 = vunpack.c.l.s4 1966171168
    %v540 = vunpack.c.0.s8 %v539
    %v541 = vlaneseq
    %v542 = vshrl.u32 %v541, 7
    %v543 = vsub.s32 %v540, %v542
    %v544 = vrot.slane %v537, %v543
    %v545 = vcombine.high %v166, %v168
    %v547 = vunpack.c.l.s4 1966171168
    %v548 = vunpack.c.0.s8 %v547
    %v549 = vlaneseq
    %v550 = vshrl.u32 %v549, 7
    %v551 = vsub.s32 %v548, %v550
    %v552 = vrot.slane %v545, %v551
    %v554 = vunpack.c.l.s4 1966171168
    %v555 = vunpack.c.0.s8 %v554
    %v556 = vlaneseq
    %v557 = vshrl.u32 %v556, 7
    %v558 = vsub.s32 %v555, %v557
    %v559 = vrot.slane %v552, %v558
    %v560 = vcombine.high %v170, %v172
    %v562 = vunpack.c.l.s4 1966171168
    %v563 = vunpack.c.0.s8 %v562
    %v564 = vlaneseq
    %v565 = vshrl.u32 %v564, 7
    %v566 = vsub.s32 %v563, %v565
    %v567 = vrot.slane %v560, %v566
    %v569 = vunpack.c.l.s4 1966171168
    %v570 = vunpack.c.0.s8 %v569
    %v571 = vlaneseq
    %v572 = vshrl.u32 %v571, 7
    %v573 = vsub.s32 %v570, %v572
    %v574 = vrot.slane %v567, %v573
    %v575 = vcombine.high %v174, %v176
    %v577 = vunpack.c.l.s4 1966171168
    %v578 = vunpack.c.0.s8 %v577
    %v579 = vlaneseq
    %v580 = vshrl.u32 %v579, 7
    %v581 = vsub.s32 %v578, %v580
    %v582 = vrot.slane %v575, %v581
    %v584 = vunpack.c.l.s4 1966171168
    %v585 = vunpack.c.0.s8 %v584
    %v586 = vlaneseq
    %v587 = vshrl.u32 %v586, 7
    %v588 = vsub.s32 %v585, %v587
    %v589 = vrot.slane %v582, %v588
    %v590 = vcombine.high %v178, %v180
    %v592 = vunpack.c.l.s4 1966171168
    %v593 = vunpack.c.0.s8 %v592
    %v594 = vlaneseq
    %v595 = vshrl.u32 %v594, 7
    %v596 = vsub.s32 %v593, %v595
    %v597 = vrot.slane %v590, %v596
    %v599 = vunpack.c.l.s4 1966171168
    %v600 = vunpack.c.0.s8 %v599
    %v601 = vlaneseq
    %v602 = vshrl.u32 %v601, 7
    %v603 = vsub.s32 %v600, %v602
    %v604 = vrot.slane %v597, %v603
    %v605 = vcombine.high %v182, %v184
    %v607 = vunpack.c.l.s4 1966171168
    %v608 = vunpack.c.0.s8 %v607
    %v609 = vlaneseq
    %v610 = vshrl.u32 %v609, 7
    %v611 = vsub.s32 %v608, %v610
    %v612 = vrot.slane %v605, %v611
    %v614 = vunpack.c.l.s4 1966171168
    %v615 = vunpack.c.0.s8 %v614
    %v616 = vlaneseq
    %v617 = vshrl.u32 %v616, 7
    %v618 = vsub.s32 %v615, %v617
    %v619 = vrot.slane %v612, %v618
    %v620 = vcombine.high %v186, %v188
    %v622 = vunpack.c.l.s4 1966171168
    %v623 = vunpack.c.0.s8 %v622
    %v624 = vlaneseq
    %v625 = vshrl.u32 %v624, 7
    %v626 = vsub.s32 %v623, %v625
    %v627 = vrot.slane %v620, %v626
    %v629 = vunpack.c.l.s4 1966171168
    %v630 = vunpack.c.0.s8 %v629
    %v631 = vlaneseq
    %v632 = vshrl.u32 %v631, 7
    %v633 = vsub.s32 %v630, %v632
    %v634 = vrot.slane %v627, %v633
    %v635 = vcombine.high %v190, %v192
    %v637 = vunpack.c.l.s4 1966171168
    %v638 = vunpack.c.0.s8 %v637
    %v639 = vlaneseq
    %v640 = vshrl.u32 %v639, 7
    %v641 = vsub.s32 %v638, %v640
    %v642 = vrot.slane %v635, %v641
    %v644 = vunpack.c.l.s4 1966171168
    %v645 = vunpack.c.0.s8 %v644
    %v646 = vlaneseq
    %v647 = vshrl.u32 %v646, 7
    %v648 = vsub.s32 %v645, %v647
    %v649 = vrot.slane %v642, %v648
    %v650 = vcombine.high %v194, %v196
    %v652 = vunpack.c.l.s4 1966171168
    %v653 = vunpack.c.0.s8 %v652
    %v654 = vlaneseq
    %v655 = vshrl.u32 %v654, 7
    %v656 = vsub.s32 %v653, %v655
    %v657 = vrot.slane %v650, %v656
    %v659 = vunpack.c.l.s4 1966171168
    %v660 = vunpack.c.0.s8 %v659
    %v661 = vlaneseq
    %v662 = vshrl.u32 %v661, 7
    %v663 = vsub.s32 %v660, %v662
    %v664 = vrot.slane %v657, %v663
    %v677 = vlaneseq
    %vm678 = vcmp.ge.s32.totalorder %v677, 0
    %vm679 = vcmp.lt.s32.totalorder %v677, 256
    %vm680 = vmand %vm678, %vm679
    %s681 = scalar_lea.vmem [#allocation5], 4
    %682 = vst.msk [vmem:[%s681] ss:$8 sm:$0x3] %vm680, %v499
    %683 = vst.msk [vmem:[%s681] ss:$8 sm:$0x0] %vm680, %v499
    %s684 = scalar_lea.vmem [#allocation5], 20
    %685 = vst.msk [vmem:[%s684] ss:$8 sm:$0x3] %vm680, %v514
    %686 = vst.msk [vmem:[%s684] ss:$8 sm:$0x0] %vm680, %v514
    %s687 = scalar_lea.vmem [#allocation5], 36
    %688 = vst.msk [vmem:[%s687] ss:$8 sm:$0x3] %vm680, %v529
    %689 = vst.msk [vmem:[%s687] ss:$8 sm:$0x0] %vm680, %v529
    %s690 = scalar_lea.vmem [#allocation5], 52
    %691 = vst.msk [vmem:[%s690] ss:$8 sm:$0x3] %vm680, %v544
    %692 = vst.msk [vmem:[%s690] ss:$8 sm:$0x0] %vm680, %v544
    %s693 = scalar_lea.vmem [#allocation5], 68
    %694 = vst.msk [vmem:[%s693] ss:$8 sm:$0x3] %vm680, %v559
    %695 = vst.msk [vmem:[%s693] ss:$8 sm:$0x0] %vm680, %v559
    %s696 = scalar_lea.vmem [#allocation5], 84
    %697 = vst.msk [vmem:[%s696] ss:$8 sm:$0x3] %vm680, %v574
    %698 = vst.msk [vmem:[%s696] ss:$8 sm:$0x0] %vm680, %v574
    %s699 = scalar_lea.vmem [#allocation5], 100
    %700 = vst.msk [vmem:[%s699] ss:$8 sm:$0x3] %vm680, %v589
    %701 = vst.msk [vmem:[%s699] ss:$8 sm:$0x0] %vm680, %v589
    %s702 = scalar_lea.vmem [#allocation5], 116
    %703 = vst.msk [vmem:[%s702] ss:$8 sm:$0x3] %vm680, %v604
    %704 = vst.msk [vmem:[%s702] ss:$8 sm:$0x0] %vm680, %v604
    %s705 = scalar_lea.vmem [#allocation5], 132
    %706 = vst.msk [vmem:[%s705] ss:$8 sm:$0x3] %vm680, %v619
    %707 = vst.msk [vmem:[%s705] ss:$8 sm:$0x0] %vm680, %v619
    %s708 = scalar_lea.vmem [#allocation5], 148
    %709 = vst.msk [vmem:[%s708] ss:$8 sm:$0x3] %vm680, %v634
    %710 = vst.msk [vmem:[%s708] ss:$8 sm:$0x0] %vm680, %v634
    %s711 = scalar_lea.vmem [#allocation5], 164
    %712 = vst.msk [vmem:[%s711] ss:$8 sm:$0x3] %vm680, %v649
    %713 = vst.msk [vmem:[%s711] ss:$8 sm:$0x0] %vm680, %v649
    %s714 = scalar_lea.vmem [#allocation5], 180
    %715 = vst.msk [vmem:[%s714] ss:$8 sm:$0x3] %vm680, %v664
    %716 = vst.msk [vmem:[%s714] ss:$8 sm:$0x0] %vm680, %v664
    %717 = vst [vmem:[#allocation5] sm:$0x60] %v29
    %718 = vst [vmem:[#allocation5 + $0x8] sm:$0x60] %v30
    %719 = vst [vmem:[#allocation5 + $0x10] sm:$0x60] %v31
    %720 = vst [vmem:[#allocation5 + $0x18] sm:$0x60] %v32
    %721 = vst [vmem:[#allocation5 + $0x20] sm:$0x60] %v33
    %722 = vst [vmem:[#allocation5 + $0x28] sm:$0x60] %v34
    %723 = vst [vmem:[#allocation5 + $0x30] sm:$0x60] %v35
    %724 = vst [vmem:[#allocation5 + $0x38] sm:$0x60] %v36
    %725 = vst [vmem:[#allocation5 + $0x40] sm:$0x60] %v37
    %726 = vst [vmem:[#allocation5 + $0x48] sm:$0x60] %v38
    %727 = vst [vmem:[#allocation5 + $0x50] sm:$0x60] %v39
    %728 = vst [vmem:[#allocation5 + $0x58] sm:$0x60] %v40
    %729 = vst [vmem:[#allocation5 + $0x60] sm:$0x60] %v41
    %730 = vst [vmem:[#allocation5 + $0x68] sm:$0x60] %v42
    %731 = vst [vmem:[#allocation5 + $0x70] sm:$0x60] %v43
    %732 = vst [vmem:[#allocation5 + $0x78] sm:$0x60] %v44
    %733 = vst [vmem:[#allocation5 + $0x80] sm:$0x60] %v45
    %734 = vst [vmem:[#allocation5 + $0x88] sm:$0x60] %v46
    %735 = vst [vmem:[#allocation5 + $0x90] sm:$0x60] %v47
    %736 = vst [vmem:[#allocation5 + $0x98] sm:$0x60] %v48
    %737 = vst [vmem:[#allocation5 + $0xa0] sm:$0x60] %v49
    %738 = vst [vmem:[#allocation5 + $0xa8] sm:$0x60] %v50
    %739 = vst [vmem:[#allocation5 + $0xb0] sm:$0x60] %v51
    %740 = vst [vmem:[#allocation5 + $0xb8] sm:$0x60] %v52
    // Predicated region
    $region18: #{tpu_custom_call.1} parent=1 // pred_check
      _
    $region19: #{tpu_custom_call.1} parent=1 // pred_check_branch
      %742 = sbr.rel (0) target = $region21
    $region20: #{tpu_custom_call.1} parent=1 // pred_region
      %s744 = ssub.s32 3072, 3072
      %745 = vsyncadd [#allocation4], %s744
      %s746 = sshll.u32 [#allocation5], 4
      %s747 = int_to_ptr.vmem [resolvable:$true] %s746
      %752 = dma.vmem_to_hbm [thread:$0]  %s747, 3072, %s3, [#allocation4], 256, 256, 16
    $region21: #{tpu_custom_call.1} parent=1 // pred_fallthru
      _
    // Predicated region
    $region22: #{tpu_custom_call.1} parent=1 // pred_check
      _
    $region23: #{tpu_custom_call.1} parent=1 // pred_check_branch
      %754 = sbr.rel (0) target = $region25
    $region24: #{tpu_custom_call.1} parent=1 // pred_region
      %755 = dma.done [#allocation4], 3072
    $region25: #{tpu_custom_call.1} parent=1 // pred_fallthru
      _
    %756 = vsyncpa [#allocation3], 1
    %757 = vsyncpa [#allocation4], 1

</llo_original>
